<compile_context>
chip_gen: v7x
topology: tpu7x:2x2x1
jax: 0.10.0
libtpu: 0.0.40
codegen_flags: <defaults>
</compile_context>

<pallas_src>
import functools

import jax
import jax.numpy as jnp
from jax import lax
from jax.experimental import pallas as pl
from jax.experimental.pallas import tpu as pltpu


@functools.lru_cache(maxsize=None)
def _roll_matches_jnp():
    """Probe pltpu.roll's shift-sign convention once (matches jnp.roll on
    current JAX; probed so a convention change can never silently flip taps)."""
    def probe(x_ref, o_ref):
        o_ref[...] = pltpu.roll(x_ref[...], 1, axis=1)

    x = jnp.tile(jnp.arange(128, dtype=jnp.float32)[None, :], (8, 1))
    y = pl.pallas_call(
        probe, out_shape=jax.ShapeDtypeStruct((8, 128), jnp.float32))(x)
    return bool(y[0, 0] > 64.0)  # jnp.roll: out[:,0]==127 ; flipped: ==1


def inconv_kernel(H, W, roll_like_jnp, x_ref, w1_ref, w2_ref, w3_ref, bn_ref,
                  sew1_ref, seb1_ref, sew2_ref, seb2_ref, o_ref):
    """Fused inconv forward for one batch tile.

    x_ref   : (B, Cin_pad, P)  input, P = H*W on the lane axis
    w*_ref  : (Cout, 9*Cin)    im2col conv weights, tap-major rows
                               (w2 already has bn2_scale folded in)
    bn_ref  : (3, C, 1)        rows = bn1_scale, bn1_bias, bn2_bias
    sew1_ref: (C, Cse)  seb1_ref: (1, Cse)   SE squeeze 1x1 conv (transposed)
    sew2_ref: (Cse, C)  seb2_ref: (1, C)     SE excite 1x1 conv (transposed)
    o_ref   : (B, C, P)
    """
    P = H * W
    x = x_ref[...].astype(jnp.float32)                       # (B, Cin_pad, P)

    # ---- 9 tap border masks: computed ONCE, shared by all three convs ------
    pix = lax.broadcasted_iota(jnp.int32, (1, P), 1)
    colp = pix % W
    rowp = pix // W
    tap_offsets, tap_masks = [], []
    for dy in (-1, 0, 1):
        for dx in (-1, 0, 1):
            tap_offsets.append(dy * W + dx)
            if dy == 0 and dx == 0:
                tap_masks.append(None)                       # center: identity
            else:
                valid = ((rowp + dy >= 0) & (rowp + dy < H) &
                         (colp + dx >= 0) & (colp + dx < W))
                tap_masks.append(valid.astype(jnp.float32))  # (1, P)

    def conv3x3(inp, w_ref):
        """inp (B, Cin, P) -> (B, Cout, P): one batched im2col matmul."""
        Bc, Cc, Pp = inp.shape
        flat = inp.reshape(Bc * Cc, Pp)                      # free reshape
        taps = []
        for off, m in zip(tap_offsets, tap_masks):
            if m is None:
                taps.append(inp)
            else:
                # Lane rotation on the XLU; wrapped pixels are always
                # border-invalid so the mask multiply zeroes them.
                shift = ((-off) if roll_like_jnp else off) % Pp
                rolled = pltpu.roll(flat, shift, axis=1)
                taps.append(rolled.reshape(Bc, Cc, Pp) * m)
        patches = jnp.concatenate(taps, axis=1)              # (B, 9*Cin, P)
        w = w_ref[...]                                       # (Cout, 9*Cin)
        wb = jnp.broadcast_to(w, (Bc,) + w.shape)            # hoisted, used once
        return jnp.einsum("bok,bkp->bop", wb, patches,
                          preferred_element_type=jnp.float32)

    bn = bn_ref[...]                                         # (3, C, 1)
    bn1s, bn1b, bn2b = bn[0], bn[1], bn[2]                   # each (C, 1)

    # inconv.conv1 -> relu
    h = jax.nn.relu(conv3x3(x, w1_ref))                      # (B, C, P)

    # SEBasicBlock (stride=1, inplanes==planes -> identity shortcut)
    res = h
    t = jax.nn.relu(h * bn1s + bn1b)                         # bn1 (folded affine)
    t = conv3x3(t, w2_ref)                                   # conv (bn2 scale folded)
    t = jax.nn.relu(t + bn2b)                                # bn2 bias + relu
    t = conv3x3(t, w3_ref)                                   # block conv2

    # SELayer: global avg pool -> 1x1 conv + relu -> 1x1 conv + sigmoid
    pooled = jnp.mean(t, axis=2)                             # (B, C) lane reduce
    z = jax.nn.relu(jnp.dot(pooled, sew1_ref[...],
                            preferred_element_type=jnp.float32) + seb1_ref[...])
    s = jax.nn.sigmoid(jnp.dot(z, sew2_ref[...],
                               preferred_element_type=jnp.float32) + seb2_ref[...])

    o_ref[...] = (t * s[:, :, None] + res).astype(o_ref.dtype)  # lane-dense store


def _num_tensorcores_per_device():
    """1 on v2/v3/v5e/v6e; 2 on megacore-style chips (v4/v5p) and v7x."""
    try:
        kind = jax.devices()[0].device_kind.lower()
    except Exception:
        return 1
    return 2 if any(t in kind for t in ("v4", "v5p", "v7", "7x")) else 1


def _pick_batch_tile(n, n_cores):
    """Samples per grid step. Single-TC: the whole batch in ONE step (per-step
    overhead ~0.35-0.6us dominates this tiny compute). Multi-TC: keep >=2
    'parallel' steps so megacore can shard samples across TensorCores."""
    if n_cores <= 1 or n < 2:
        return n
    for bt in range(n // 2, 0, -1):
        if n % bt == 0:
            return bt
    return n


def _prep_w(w_oihw):
    """(Cout, Cin, 3, 3) -> (Cout, 9*Cin) matching tap-major im2col row order."""
    co, ci, kh, kw = w_oihw.shape
    return w_oihw.transpose(0, 2, 3, 1).reshape(co, kh * kw * ci)


def inconv_forward(x_nchw, p):
    N, Cin, H, W = x_nchw.shape
    P = H * W
    C = p["w1"].shape[0]
    Cse = p["se_w1"].shape[0]
    Cpad = max(8, ((Cin + 7) // 8) * 8)      # full f32 sublane groups per tap

    B = _pick_batch_tile(N, _num_tensorcores_per_device())
    G = N // B

    # Free reshape only (no host transposes). Pad Cin so tap concat is pure
    # vreg placement and conv1 uses the same K-per-tap as the other convs.
    x_r = x_nchw.reshape(N, Cin, P)
    w1 = p["w1"]
    if Cpad != Cin:
        x_r = jnp.pad(x_r, ((0, 0), (0, Cpad - Cin), (0, 0)))
        w1 = jnp.pad(w1, ((0, 0), (0, Cpad - Cin), (0, 0), (0, 0)))

    w1m = _prep_w(w1)                                        # (C, 9*Cpad)
    # bn2 follows the block's first conv with no nonlinearity in between:
    # fold its scale into the weight rows (bias + relu stay in the kernel).
    w2m = p["bn2_scale"][:, None] * _prep_w(p["w2"])         # (C, 9*C)
    w3m = _prep_w(p["w3"])                                   # (C, 9*C)
    bn_slab = jnp.stack([p["bn1_scale"], p["bn1_bias"], p["bn2_bias"]],
                        axis=0).reshape(3, C, 1)
    sew1_t = p["se_w1"].T                                    # (C, Cse)
    seb1 = p["se_b1"].reshape(1, Cse)
    sew2_t = p["se_w2"].T                                    # (Cse, C)
    seb2 = p["se_b2"].reshape(1, C)

    def full_spec(shape):
        nd = len(shape)
        return pl.BlockSpec(shape, lambda i, _nd=nd: (0,) * _nd)

    kern = functools.partial(inconv_kernel, H, W, _roll_matches_jnp())

    out = pl.pallas_call(
        kern,
        out_shape=jax.ShapeDtypeStruct((N, C, P), x_nchw.dtype),
        grid_spec=pltpu.PrefetchScalarGridSpec(
            num_scalar_prefetch=0,
            grid=(G,),
            in_specs=[
                pl.BlockSpec((B, Cpad, P), lambda i: (i, 0, 0)),
                full_spec(w1m.shape),
                full_spec(w2m.shape),
                full_spec(w3m.shape),
                full_spec(bn_slab.shape),
                full_spec(sew1_t.shape), full_spec(seb1.shape),
                full_spec(sew2_t.shape), full_spec(seb2.shape),
            ],
            out_specs=pl.BlockSpec((B, C, P), lambda i: (i, 0, 0)),
        ),
        compiler_params=pltpu.CompilerParams(
            dimension_semantics=("parallel",)),
    )(x_r, w1m, w2m, w3m, bn_slab, sew1_t, seb1, sew2_t, seb2)

    return out.reshape(N, C, H, W)


def ref_forward(x, p):
    """Pure-JAX NCHW reference (same inference-mode BN semantics)."""
    conv = lambda a, w: lax.conv_general_dilated(
        a, w, window_strides=(1, 1), padding=((1, 1), (1, 1)),
        dimension_numbers=("NCHW", "OIHW", "NCHW"))
    bn = lambda a, s, b: a * s.reshape(1, -1, 1, 1) + b.reshape(1, -1, 1, 1)

    h = jax.nn.relu(conv(x, p["w1"]))
    res = h
    t = jax.nn.relu(bn(h, p["bn1_scale"], p["bn1_bias"]))
    t = conv(t, p["w2"])
    t = jax.nn.relu(bn(t, p["bn2_scale"], p["bn2_bias"]))
    t = conv(t, p["w3"])
    y = jnp.mean(t, axis=(2, 3))                                # (N, C)
    z = jax.nn.relu(y @ p["se_w1"].T + p["se_b1"])              # (N, Cse)
    s = jax.nn.sigmoid(z @ p["se_w2"].T + p["se_b2"])           # (N, C)
    return t * s[:, :, None, None] + res


def make_params(key, in_ch, out_ch, reduction=4):
    ks = jax.random.split(key, 14)
    C, Cse = out_ch, out_ch // reduction

    def bn_fold(kg, kb, km, kv, c, eps=1e-5):
        gamma = 1.0 + 0.1 * jax.random.normal(kg, (c,), jnp.float32)
        beta = 0.1 * jax.random.normal(kb, (c,), jnp.float32)
        mean = 0.1 * jax.random.normal(km, (c,), jnp.float32)
        var = 0.5 + 0.5 * jnp.abs(jax.random.normal(kv, (c,), jnp.float32))
        scale = gamma / jnp.sqrt(var + eps)
        bias = beta - mean * scale
        return scale, bias

    bn1_s, bn1_b = bn_fold(ks[3], ks[4], ks[5], ks[6], C)
    bn2_s, bn2_b = bn_fold(ks[7], ks[8], ks[9], ks[10], C)
    return {
        # conv weights in PyTorch OIHW layout
        "w1": 0.2 * jax.random.normal(ks[0], (C, in_ch, 3, 3), jnp.float32),
        "w2": 0.2 * jax.random.normal(ks[1], (C, C, 3, 3), jnp.float32),
        "w3": 0.2 * jax.random.normal(ks[2], (C, C, 3, 3), jnp.float32),
        "bn1_scale": bn1_s, "bn1_bias": bn1_b,
        "bn2_scale": bn2_s, "bn2_bias": bn2_b,
        "se_w1": 0.3 * jax.random.normal(ks[11], (Cse, C), jnp.float32),
        "se_b1": jnp.zeros((Cse,), jnp.float32) + 0.05,
        "se_w2": 0.3 * jax.random.normal(ks[12], (C, Cse), jnp.float32),
        "se_b2": jnp.zeros((C,), jnp.float32) - 0.05,
    }


if __name__ == "__main__":
    key = jax.random.PRNGKey(0)
    k_x, k_p = jax.random.split(key)
    N, in_ch, out_ch, H, W = 2, 4, 8, 16, 16
    x = jax.random.normal(k_x, (N, in_ch, H, W), jnp.float32)   # NCHW like PyTorch
    params = make_params(k_p, in_ch, out_ch)

    out = jax.block_until_ready(inconv_forward(x, params))
    ref = jax.block_until_ready(ref_forward(x, params))

    assert out.shape == (N, out_ch, H, W), out.shape
    err = float(jnp.max(jnp.abs(out - ref)))
    assert jnp.allclose(out, ref, rtol=1e-3, atol=1e-3), err
    print("KERNEL_OK")
</pallas_src>

<mosaic_0001>
module attributes {stable_mosaic.version = 11 : i64} {
  func.func @probe(%arg0: memref<8x128xf32, #tpu.memory_space<vmem>>, %arg1: memref<8x128xf32, #tpu.memory_space<vmem>>) attributes {dimension_semantics = [], scalar_prefetch = 0 : i64, scratch_operands = 0 : i64, tpu.core_type = #tpu.core_type<tc>} {
    %c0 = arith.constant 0 : index
    %c0_0 = arith.constant 0 : index
    %0 = vector.load %arg0[%c0, %c0_0] : memref<8x128xf32, #tpu.memory_space<vmem>>, vector<8x128xf32>
    %c1_i32 = arith.constant 1 : i32
    %1 = tpu.dynamic_rotate %0 by %c1_i32 dim 1 : vector<8x128xf32>, i32 -> vector<8x128xf32>
    %c0_1 = arith.constant 0 : index
    %c0_2 = arith.constant 0 : index
    %2 = vector.load %arg1[%c0_1, %c0_2] : memref<8x128xf32, #tpu.memory_space<vmem>>, vector<8x128xf32>
    tpu.vector_store %arg1[%c0_1, %c0_2], %1 {strides = array<i32>} : memref<8x128xf32, #tpu.memory_space<vmem>>, vector<8x128xf32>,
    return
  }
}

</mosaic_0001>

<llo_original>
// kernel: tpu_custom_call.1
$region0: #{tpu_custom_call.1}
  #allocation0 [shape = 'u32[]', space=smem, size = 0x4, offset = 0x4, fixed_abs, tag = 'smem constant byte address 0x4 - core index']
  #allocation1 [shape = 'u32[144,128]{1,0:T(1,128)}', space=vmem, size = 0x12000, scoped, tag = 'internal scratch']
  %s0 = inlined_call_operand.hbm [shape: f32[8,128], index: 0, kind: input, shape index: {}]
  %s1 = inlined_call_operand.hbm [shape: f32[8,128], index: 1, kind: output, shape index: {}]
  %s2 = sld [smem:[#allocation0]]
  $region18: #{tpu_custom_call.1} parent=0
    _
  %s4 = ssub.s32 1, %s2
  %s5 = scalar_select 0, %s4, %s2
  $region1: #{tpu_custom_call.1} parent=0
    #allocation2 [shape = 'u8[4096]{0}', space=vmem, size = 0x1000, scoped, tag = 'input window, operand 0, single buffered']
    #allocation3 [shape = 's32[1]{0}', space=sflag, size = 0x4, scoped, tag = 'scoped memory for tpu_custom_call.1']
    #allocation4 [shape = 's32[1]{0}', space=sflag, size = 0x4, scoped, tag = 'scoped memory for tpu_custom_call.1']
    #allocation5 [shape = 'u8[4096]{0}', space=vmem, size = 0x1000, scoped, tag = 'output window, operand 0, single buffered']
    %6 = vsyncpa [#allocation3], 0
    %7 = vsyncpa [#allocation4], 0
    // Predicated region
    $region2: #{tpu_custom_call.1} parent=1 // pred_check
      _
    $region3: #{tpu_custom_call.1} parent=1 // pred_check_branch
      %9 = sbr.rel (0) target = $region5
    $region4: #{tpu_custom_call.1} parent=1 // pred_region
      %s11 = ssub.s32 128, 128
      %12 = vsyncadd [#allocation3], %s11
      %s14 = sshll.u32 [#allocation2], 4
      %s15 = int_to_ptr.vmem [resolvable:$true] %s14
      %17 = dma.hbm_to_vmem [thread:$0]  %s0, 128, %s15, [#allocation3]
    $region5: #{tpu_custom_call.1} parent=1 // pred_fallthru
      _
    // Predicated region
    $region6: #{tpu_custom_call.1} parent=1 // pred_check
      _
    $region7: #{tpu_custom_call.1} parent=1 // pred_check_branch
      %19 = sbr.rel (0) target = $region9
    $region8: #{tpu_custom_call.1} parent=1 // pred_region
      %20 = dma.done [#allocation3], 128
    $region9: #{tpu_custom_call.1} parent=1 // pred_fallthru
      _
    %v21 = vld [vmem:[#allocation2] sm:$0xff]
    %22 = vrot.lane.b32.xlu0 %v21, 1
    %v23 = vpop.permute.xlu0 %22
    %24 = vst [vmem:[#allocation5] sm:$0xff] %v23
    // Predicated region
    $region10: #{tpu_custom_call.1} parent=1 // pred_check
      _
    $region11: #{tpu_custom_call.1} parent=1 // pred_check_branch
      %26 = sbr.rel (0) target = $region13
    $region12: #{tpu_custom_call.1} parent=1 // pred_region
      %s28 = ssub.s32 128, 128
      %29 = vsyncadd [#allocation4], %s28
      %s31 = sshll.u32 [#allocation5], 4
      %s32 = int_to_ptr.vmem [resolvable:$true] %s31
      %34 = dma.vmem_to_hbm [thread:$0]  %s32, 128, %s1, [#allocation4]
    $region13: #{tpu_custom_call.1} parent=1 // pred_fallthru
      _
    // Predicated region
    $region14: #{tpu_custom_call.1} parent=1 // pred_check
      _
    $region15: #{tpu_custom_call.1} parent=1 // pred_check_branch
      %36 = sbr.rel (0) target = $region17
    $region16: #{tpu_custom_call.1} parent=1 // pred_region
      %37 = dma.done [#allocation4], 128
    $region17: #{tpu_custom_call.1} parent=1 // pred_fallthru
      _
    %38 = vsyncpa [#allocation3], 1
    %39 = vsyncpa [#allocation4], 1

</llo_original>
